<compile_context>
chip_gen: v5e
topology: v5e:2x2
jax: 0.10.0
libtpu: 0.0.40
codegen_flags: <defaults>
</compile_context>

<pallas_src>
import functools

import jax
import jax.numpy as jnp
from jax import lax
from jax.experimental import pallas as pl
from jax.experimental.pallas import tpu as pltpu

_PAD_NEG = -1e30  # fill for padded classes / rows: vanishes in max & exp


def _round_up(x: int, m: int) -> int:
    return (x + m - 1) // m * m


def _smce_kernel(logits_ref, y_ref, out_ref, row_acc, *,
                 prob: float, num_classes: int, n_rows: int,
                 tile_m: int, c_padded: int):
    t = pl.program_id(1)           # inner (reduction / accumulation) axis
    nt = pl.num_programs(1)

    @pl.when(t == 0)
    def _():
        row_acc[...] = jnp.zeros_like(row_acc)

    x = logits_ref[...].astype(jnp.float32)            # (tile_m, c_padded)
    y = y_ref[...]                                     # (tile_m, 1) int32

    col = lax.broadcasted_iota(jnp.int32, x.shape, 1)  # class index per lane

    # numerically stable softmax stats; padded columns hold -1e30 so they
    # contribute nothing to max / exp-sum.
    m = jnp.max(x, axis=-1, keepdims=True)             # (tile_m, 1)
    e = jnp.exp(x - m)
    lse = jnp.log(jnp.sum(e, axis=-1, keepdims=True))
    mlse = m + lse                                     # (tile_m, 1)

    # sum_j x over the *real* classes only.
    if c_padded == num_classes:
        sum_x = jnp.sum(x, axis=-1, keepdims=True)
    else:
        sum_x = jnp.sum(jnp.where(col < num_classes, x, 0.0),
                        axis=-1, keepdims=True)
    # x[i, y_i] via masked select (y_i < num_classes always).
    x_y = jnp.sum(jnp.where(col == y, x, 0.0), axis=-1, keepdims=True)

    off = (1.0 - prob) / (num_classes - 1)
    # per-row sum_j target_ij * log_p_ij, with the target matrix eliminated:
    #   off * (sum_j x - C*(m+lse)) + (prob - off) * (x[y] - (m+lse))
    row_loss = (off * (sum_x - num_classes * mlse)
                + (prob - off) * (x_y - mlse))          # (tile_m, 1)

    # mask out padded batch rows
    tile_idx = pl.program_id(0) * nt + t
    row = tile_idx * tile_m + lax.broadcasted_iota(jnp.int32, (tile_m, 1), 0)
    row_loss = jnp.where(row < n_rows, row_loss, 0.0)

    row_acc[...] += row_loss                            # pure VPU accumulate

    # epilogue: single cross-lane reduce + lane-dense (8,128) store per slice
    @pl.when(t == nt - 1)
    def _():
        total = -jnp.sum(row_acc[...])
        out_ref[...] = jnp.full(out_ref.shape, total, dtype=jnp.float32)


def regularized_smce(logits: jax.Array, y: jax.Array, prob: float = 0.95,
                     tile_m: int = 256, num_slices: int | None = None
                     ) -> jax.Array:
    """Pallas implementation of RegularizedSMCE.forward. Returns a scalar."""
    n, c = logits.shape
    if c < 2:
        # same division-by-zero constraint as the PyTorch original
        raise ValueError("num_classes must be >= 2")

    c_pad = _round_up(c, 128)                       # lane-dense class axis

    # pick a batch tile: multiple of 8, no bigger than the (padded) batch,
    # shrunk until the double-buffered working set fits a conservative budget.
    tile_m = max(8, _round_up(min(int(tile_m), n), 8))
    vmem_budget = 32 * 1024 * 1024
    while tile_m > 8 and tile_m * c_pad * 32 > vmem_budget:
        tile_m = max(8, (tile_m // 2) // 8 * 8)

    n_tiles = pl.cdiv(n, tile_m)
    if num_slices is None:
        num_slices = 2 if n_tiles >= 2 else 1       # feed v7x's 2nd TensorCore
    num_slices = max(1, min(int(num_slices), n_tiles))
    inner = pl.cdiv(n_tiles, num_slices)
    n_pad = num_slices * inner * tile_m

    # pad logits (rows + classes) with -1e30; pad labels with 0. Padded rows
    # are masked inside the kernel.
    if (n_pad, c_pad) != (n, c):
        lp = jnp.full((n_pad, c_pad), _PAD_NEG, dtype=logits.dtype)
        lp = lp.at[:n, :c].set(logits)
    else:
        lp = logits
    y2d = jnp.zeros((n_pad, 1), jnp.int32).at[:n, 0].set(y.astype(jnp.int32))

    kernel = functools.partial(
        _smce_kernel, prob=float(prob), num_classes=c,
        n_rows=n, tile_m=tile_m, c_padded=c_pad)

    out = pl.pallas_call(
        kernel,
        out_shape=jax.ShapeDtypeStruct((num_slices * 8, 128), jnp.float32),
        grid_spec=pltpu.PrefetchScalarGridSpec(
            num_scalar_prefetch=0,
            grid=(num_slices, inner),
            in_specs=[
                pl.BlockSpec((tile_m, c_pad), lambda s, t: (s * inner + t, 0)),
                pl.BlockSpec((tile_m, 1), lambda s, t: (s * inner + t, 0)),
            ],
            # one (8,128) output block per slice, resident across the inner axis
            out_specs=pl.BlockSpec((8, 128), lambda s, t: (s, 0)),
            scratch_shapes=[pltpu.VMEM((tile_m, 1), jnp.float32)],
        ),
        compiler_params=pltpu.CompilerParams(
            dimension_semantics=("parallel", "arbitrary"),
            vmem_limit_bytes=48 * 1024 * 1024,
        ),
    )(lp, y2d)

    # every element of a slice's (8,128) block holds that slice's partial loss
    return jnp.sum(out[::8, 0])


def _reference(logits, y, prob=0.95):
    logits = logits.astype(jnp.float32)
    log_p = jax.nn.log_softmax(logits, axis=-1)
    c = logits.shape[1]
    target = jnp.full_like(log_p, (1.0 - prob) / (c - 1))
    target = target.at[jnp.arange(logits.shape[0]), y].set(prob)
    return -(target * log_p).sum()


if __name__ == "__main__":
    key = jax.random.PRNGKey(0)

    # 1) small demo shape (batch=16, classes=32), f32
    k1, k2, key = jax.random.split(key, 3)
    logits = jax.random.normal(k1, (16, 32), dtype=jnp.float32)
    y = jax.random.randint(k2, (16,), 0, 32, dtype=jnp.int32)
    loss = regularized_smce(logits, y, prob=0.95)
    jax.block_until_ready(loss)
    ref = _reference(logits, y, prob=0.95)
    assert jnp.allclose(loss, ref, rtol=2e-5, atol=1e-3), (loss, ref)

    # 2) ragged batch (tail-row masking)
    loss = regularized_smce(logits[:13], y[:13], prob=0.95)
    ref = _reference(logits[:13], y[:13], prob=0.95)
    assert jnp.allclose(loss, ref, rtol=2e-5, atol=1e-3), (loss, ref)

    # 3) multi-tile, 2 parallel slices, non-multiple-of-128 classes
    k1, k2, key = jax.random.split(key, 3)
    logits3 = jax.random.normal(k1, (64, 160), dtype=jnp.float32)
    y3 = jax.random.randint(k2, (64,), 0, 160, dtype=jnp.int32)
    loss = regularized_smce(logits3, y3, prob=0.9, tile_m=16)
    ref = _reference(logits3, y3, prob=0.9)
    assert jnp.allclose(loss, ref, rtol=2e-5, atol=1e-3), (loss, ref)

    # 4) bf16 logits (upcast inside the kernel)
    logits_bf = logits.astype(jnp.bfloat16)
    loss = regularized_smce(logits_bf, y, prob=0.95)
    ref = _reference(logits_bf, y, prob=0.95)
    assert jnp.allclose(loss, ref, rtol=2e-5, atol=1e-3), (loss, ref)

    print("KERNEL_OK")
</pallas_src>

<mosaic_0001>
module attributes {stable_mosaic.version = 11 : i64} {
  func.func @_smce_kernel(%arg0: i32, %arg1: i32, %arg2: memref<16x128xf32, #tpu.memory_space<vmem>>, %arg3: memref<16x1xi32, #tpu.memory_space<vmem>>, %arg4: memref<8x128xf32, #tpu.memory_space<vmem>>, %arg5: memref<16x1xf32, #tpu.memory_space<vmem>>) attributes {dimension_semantics = [#tpu.dimension_semantics<parallel>, #tpu.dimension_semantics<arbitrary>], iteration_bounds = array<i64: 1, 1>, scalar_prefetch = 0 : i64, scratch_operands = 1 : i64, tpu.core_type = #tpu.core_type<tc>, window_params = [{transform_indices = @transform_0, window_bounds = array<i64: 16, 128>}, {transform_indices = @transform_1, window_bounds = array<i64: 16, 1>}, {transform_indices = @transform_2, window_bounds = array<i64: 8, 128>}]} {
    %c0_i32 = arith.constant 0 : i32
    %0 = arith.cmpi eq, %arg1, %c0_i32 : i32
    %1 = arith.extui %0 : i1 to i32
    %c0_i32_0 = arith.constant 0 : i32
    %2 = arith.cmpi ne, %1, %c0_i32_0 : i32
    scf.if %2 {
      %cst_20 = arith.constant 0.000000e+00 : f32
      %52 = vector.broadcast %cst_20 : f32 to vector<16x1xf32>
      %c0_21 = arith.constant 0 : index
      %c0_22 = arith.constant 0 : index
      %53 = vector.load %arg5[%c0_21, %c0_22] : memref<16x1xf32, #tpu.memory_space<vmem>>, vector<16x1xf32>
      tpu.vector_store %arg5[%c0_21, %c0_22], %52 {strides = array<i32>} : memref<16x1xf32, #tpu.memory_space<vmem>>, vector<16x1xf32>,
    } else {
    }
    %c0 = arith.constant 0 : index
    %c0_1 = arith.constant 0 : index
    %3 = vector.load %arg2[%c0, %c0_1] : memref<16x128xf32, #tpu.memory_space<vmem>>, vector<16x128xf32>
    %c0_2 = arith.constant 0 : index
    %c0_3 = arith.constant 0 : index
    %4 = vector.load %arg3[%c0_2, %c0_3] : memref<16x1xi32, #tpu.memory_space<vmem>>, vector<16x1xi32>
    %5 = tpu.iota {dimensions = array<i32: 1>} : vector<16x128xi32>
    %cst = arith.constant dense<0xFF800000> : vector<16xf32>
    %6 = vector.multi_reduction <maximumf>, %3, %cst [1] : vector<16x128xf32> to vector<16xf32>
    %7 = vector.shape_cast %6 : vector<16xf32> to vector<16x1xf32>
    %8 = vector.broadcast %7 : vector<16x1xf32> to vector<16x128xf32>
    %9 = arith.subf %3, %8 : vector<16x128xf32>
    %10 = math.exp %9 : vector<16x128xf32>
    %cst_4 = arith.constant dense<0.000000e+00> : vector<16xf32>
    %11 = vector.multi_reduction <add>, %10, %cst_4 [1] : vector<16x128xf32> to vector<16xf32>
    %12 = vector.shape_cast %11 : vector<16xf32> to vector<16x1xf32>
    %13 = math.log %12 : vector<16x1xf32>
    %14 = arith.addf %7, %13 : vector<16x1xf32>
    %c32_i32 = arith.constant 32 : i32
    %15 = vector.broadcast %c32_i32 : i32 to vector<16x128xi32>
    %16 = arith.cmpi slt, %5, %15 : vector<16x128xi32>
    %cst_5 = arith.constant 0.000000e+00 : f32
    %17 = vector.broadcast %cst_5 : f32 to vector<16x128xf32>
    %18 = arith.select %16, %3, %17 : vector<16x128xi1>, vector<16x128xf32>
    %cst_6 = arith.constant dense<0.000000e+00> : vector<16xf32>
    %19 = vector.multi_reduction <add>, %18, %cst_6 [1] : vector<16x128xf32> to vector<16xf32>
    %20 = vector.shape_cast %19 : vector<16xf32> to vector<16x1xf32>
    %21 = vector.broadcast %4 : vector<16x1xi32> to vector<16x128xi32>
    %22 = arith.cmpi eq, %5, %21 : vector<16x128xi32>
    %cst_7 = arith.constant 0.000000e+00 : f32
    %23 = vector.broadcast %cst_7 : f32 to vector<16x128xf32>
    %24 = arith.select %22, %3, %23 : vector<16x128xi1>, vector<16x128xf32>
    %cst_8 = arith.constant dense<0.000000e+00> : vector<16xf32>
    %25 = vector.multi_reduction <add>, %24, %cst_8 [1] : vector<16x128xf32> to vector<16xf32>
    %26 = vector.shape_cast %25 : vector<16xf32> to vector<16x1xf32>
    %cst_9 = arith.constant 3.200000e+01 : f32
    %27 = vector.broadcast %cst_9 : f32 to vector<16x1xf32>
    %28 = arith.mulf %27, %14 : vector<16x1xf32>
    %29 = arith.subf %20, %28 : vector<16x1xf32>
    %cst_10 = arith.constant 0.0016129032 : f32
    %30 = vector.broadcast %cst_10 : f32 to vector<16x1xf32>
    %31 = arith.mulf %30, %29 : vector<16x1xf32>
    %32 = arith.subf %26, %14 : vector<16x1xf32>
    %cst_11 = arith.constant 0.948387086 : f32
    %33 = vector.broadcast %cst_11 : f32 to vector<16x1xf32>
    %34 = arith.mulf %33, %32 : vector<16x1xf32>
    %35 = arith.addf %31, %34 : vector<16x1xf32>
    %c1_i32 = arith.constant 1 : i32
    %36 = arith.muli %arg0, %c1_i32 : i32
    %37 = arith.addi %36, %arg1 : i32
    %c16_i32 = arith.constant 16 : i32
    %38 = arith.muli %37, %c16_i32 : i32
    %39 = tpu.iota {dimensions = array<i32: 0>} : vector<16x1xi32>
    %40 = vector.broadcast %38 : i32 to vector<16x1xi32>
    %41 = arith.addi %40, %39 : vector<16x1xi32>
    %c16_i32_12 = arith.constant 16 : i32
    %42 = vector.broadcast %c16_i32_12 : i32 to vector<16x1xi32>
    %43 = arith.cmpi slt, %41, %42 : vector<16x1xi32>
    %cst_13 = arith.constant 0.000000e+00 : f32
    %44 = vector.broadcast %cst_13 : f32 to vector<16x1xf32>
    %45 = arith.select %43, %35, %44 : vector<16x1xi1>, vector<16x1xf32>
    %c0_14 = arith.constant 0 : index
    %c0_15 = arith.constant 0 : index
    %46 = vector.load %arg5[%c0_14, %c0_15] : memref<16x1xf32, #tpu.memory_space<vmem>>, vector<16x1xf32>
    %47 = arith.addf %46, %45 : vector<16x1xf32>
    %c0_16 = arith.constant 0 : index
    %c0_17 = arith.constant 0 : index
    %48 = vector.load %arg5[%c0_16, %c0_17] : memref<16x1xf32, #tpu.memory_space<vmem>>, vector<16x1xf32>
    tpu.vector_store %arg5[%c0_16, %c0_17], %47 {strides = array<i32>} : memref<16x1xf32, #tpu.memory_space<vmem>>, vector<16x1xf32>,
    %c0_i32_18 = arith.constant 0 : i32
    %49 = arith.cmpi eq, %arg1, %c0_i32_18 : i32
    %50 = arith.extui %49 : i1 to i32
    %c0_i32_19 = arith.constant 0 : i32
    %51 = arith.cmpi ne, %50, %c0_i32_19 : i32
    scf.if %51 {
      %c0_20 = arith.constant 0 : index
      %c0_21 = arith.constant 0 : index
      %52 = vector.load %arg5[%c0_20, %c0_21] : memref<16x1xf32, #tpu.memory_space<vmem>>, vector<16x1xf32>
      %53 = vector.shape_cast %52 : vector<16x1xf32> to vector<1x16x1xf32>
      %cst_22 = arith.constant dense<0.000000e+00> : vector<1xf32>
      %54 = vector.multi_reduction <add>, %53, %cst_22 [1, 2] : vector<1x16x1xf32> to vector<1xf32>
      %55 = vector.shape_cast %54 : vector<1xf32> to vector<1x1x1xf32>
      %56 = vector.extract %55[0, 0, 0] : f32 from vector<1x1x1xf32>
      %cst_23 = arith.constant 0.000000e+00 : f32
      %57 = arith.subf %cst_23, %56 : f32
      %58 = vector.broadcast %57 : f32 to vector<8x128xf32>
      %c0_24 = arith.constant 0 : index
      %c0_25 = arith.constant 0 : index
      %59 = vector.load %arg4[%c0_24, %c0_25] : memref<8x128xf32, #tpu.memory_space<vmem>>, vector<8x128xf32>
      tpu.vector_store %arg4[%c0_24, %c0_25], %58 {strides = array<i32>} : memref<8x128xf32, #tpu.memory_space<vmem>>, vector<8x128xf32>,
    } else {
    }
    return
  }
  func.func @transform_0(%arg0: i32, %arg1: i32) -> (i32, i32) {
    %c1_i32 = arith.constant 1 : i32
    %0 = arith.muli %arg0, %c1_i32 : i32
    %1 = arith.addi %0, %arg1 : i32
    %c0_i32 = arith.constant 0 : i32
    %c0_i32_0 = arith.constant 0 : i32
    return %1, %c0_i32 : i32, i32
  }
  func.func @transform_1(%arg0: i32, %arg1: i32) -> (i32, i32) {
    %c1_i32 = arith.constant 1 : i32
    %0 = arith.muli %arg0, %c1_i32 : i32
    %1 = arith.addi %0, %arg1 : i32
    %c0_i32 = arith.constant 0 : i32
    %c0_i32_0 = arith.constant 0 : i32
    return %1, %c0_i32 : i32, i32
  }
  func.func @transform_2(%arg0: i32, %arg1: i32) -> (i32, i32) {
    %c0_i32 = arith.constant 0 : i32
    %c0_i32_0 = arith.constant 0 : i32
    return %arg0, %c0_i32 : i32, i32
  }
}

</mosaic_0001>

<llo_original>
// kernel: tpu_custom_call.1
$region0: #{tpu_custom_call.1}
  #allocation0 [shape = 'u32[]', space=smem, size = 0x4, offset = 0x4, fixed_abs, tag = 'smem constant byte address 0x4 - core index']
  #allocation1 [shape = 'u32[72,128]{1,0:T(1,128)}', space=vmem, size = 0x9000, scoped, tag = 'internal scratch']
  #allocation2 [shape = 'f32[16,1]{1,0:T(8,128)}', space=vmem, size = 0x2000, scoped, tag = 'scratch operand']
  %s0 = inlined_call_operand.vmem [shape: f32[16,128], index: 0, kind: input, shape index: {}]
  %s1 = inlined_call_operand.vmem [shape: s32[16,1], index: 1, kind: input, shape index: {}]
  %s2 = inlined_call_operand.hbm [shape: f32[8,128], index: 2, kind: output, shape index: {}]
  %s3 = sld [smem:[#allocation0]]
  $region26: #{tpu_custom_call.1} parent=0
    _
  %s5 = ssub.s32 1, %s3
  %s6 = scalar_select 0, %s5, %s3
  $region1: #{tpu_custom_call.1} parent=0
    #allocation3 [shape = 'u8[4096]{0}', space=vmem, size = 0x1000, scoped, tag = 'output window, operand 0, single buffered']
    #allocation4 [shape = 's32[1]{0}', space=sflag, size = 0x4, scoped, tag = 'scoped memory for tpu_custom_call.1']
    %7 = vsyncpa [#allocation4], 0
    // Predicated region
    $region2: #{tpu_custom_call.1} parent=1 // pred_check
      _
    $region3: #{tpu_custom_call.1} parent=1 // pred_check_branch
      %9 = sbr.rel (0) target = $region5
    $region4: #{tpu_custom_call.1} parent=1 // pred_region
      %s10 = sadd.s32 0, 0
      %s11 = smul.u32 2, %s10
      %p12 = scmp.lt.s32.totalorder %s11, 1
      %s13 = scalar_select %p12, %s11, 1
      %s14 = smul.addr %s13, 8
      %s15 = scalar_lea.vmem %s0, %s14
      %s16 = sadd.s32 0, 0
      %s17 = smul.u32 2, %s16
    $region5: #{tpu_custom_call.1} parent=1 // pred_fallthru
      _
    // Predicated region
    $region6: #{tpu_custom_call.1} parent=1 // pred_check
      _
    $region7: #{tpu_custom_call.1} parent=1 // pred_check_branch
      %19 = sbr.rel (0) target = $region9
    $region8: #{tpu_custom_call.1} parent=1 // pred_region
      %s20 = sadd.s32 0, 0
      %s21 = smul.u32 2, %s20
      %p22 = scmp.lt.s32.totalorder %s21, 1
      %s23 = scalar_select %p22, %s21, 1
      %s24 = smul.addr %s23, 8
      %s25 = scalar_lea.vmem %s1, %s24
      %s26 = sadd.s32 0, 0
      %s27 = smul.u32 2, %s26
    $region9: #{tpu_custom_call.1} parent=1 // pred_fallthru
      _
    %s28 = sadd.s32 0, 0
    %s29 = smul.u32 2, %s28
    %p30 = scmp.lt.s32.totalorder %s29, 1
    %s31 = scalar_select %p30, %s29, 1
    %s32 = smul.addr %s31, 8
    %s33 = scalar_lea.vmem %s0, %s32
    %s34 = sadd.s32 0, 0
    %s35 = smul.u32 2, %s34
    %p36 = scmp.lt.s32.totalorder %s35, 1
    %s37 = scalar_select %p36, %s35, 1
    %s38 = smul.addr %s37, 8
    %s39 = scalar_lea.vmem %s1, %s38
    %s40 = sadd.s32 0, 0
    %s41 = smul.u32 2, %s40
    %p42 = scmp.lt.s32.totalorder %s41, 1
    %s43 = scalar_select %p42, %s41, 1
    %s44 = smul.addr %s43, 8
    %s45 = scalar_lea.vmem %s0, %s44
    %s46 = sadd.s32 0, 0
    %s47 = smul.u32 2, %s46
    %s48 = sadd.s32 0, 0
    %s49 = smul.u32 2, %s48
    %p50 = scmp.lt.s32.totalorder %s49, 1
    %s51 = scalar_select %p50, %s49, 1
    %s52 = smul.addr %s51, 8
    %s53 = scalar_lea.vmem %s1, %s52
    %s54 = sadd.s32 0, 0
    %s55 = smul.u32 2, %s54
    %p56 = scmp.eq.s32.totalorder 0, 0
    // Predicated region
    $region10: #{tpu_custom_call.1} parent=1 // pred_check
      %p57 = pneg %p56
    $region11: #{tpu_custom_call.1} parent=1 // pred_check_branch
      %59 = sbr.rel (%p57) target = $region13
    $region12: #{tpu_custom_call.1} parent=1 // pred_region
      %vm60 = vcmask 7168
      %61 = vst.msk [vmem:[#allocation2] sm:$0xff] %vm60, 0.0
      %62 = vst.msk [vmem:[#allocation2 + $0x8] sm:$0xff] %vm60, 0.0
    $region13: #{tpu_custom_call.1} parent=1 // pred_fallthru
      _
    %v63 = vld [vmem:[%s45] sm:$0xff]
    %v64 = vld [vmem:[%s45 + $0x8] sm:$0xff]
    %v65 = vld [vmem:[%s53] sm:$0xff]
    %v66 = vld [vmem:[%s53 + $0x8] sm:$0xff]
    %v67 = vlaneseq
    %v68 = vand.u32 %v67, 127
    %69 = vmax.xlane.f32.xlu0 %v63
    %v70 = vpop.xlane.xlu0 %69
    %71 = vmax.xlane.f32.xlu0 %v64
    %v72 = vpop.xlane.xlu0 %71
    %v73 = vsub.f32 %v63, %v70
    %v74 = vsub.f32 %v64, %v72
    %v75 = vmul.f32 %v73, 1.442695
    %v76 = vpow.pop %v75
    %v77 = vmul.f32 %v74, 1.442695
    %v78 = vpow.pop %v77
    %79 = vadd.xlane.f32.xlu0 %v76
    %v80 = vpop.xlane.xlu0 %79
    %81 = vadd.xlane.f32.xlu0 %v78
    %v82 = vpop.xlane.xlu0 %81
    %v83 = vlog2.pop %v80
    %v84 = vmul.f32 %v83, 0.6931472
    %v85 = vlog2.pop %v82
    %v86 = vmul.f32 %v85, 0.6931472
    %v87 = vadd.f32 %v70, %v84
    %v88 = vadd.f32 %v72, %v86
    %vm89 = vcmp.lt.s32.totalorder %v68, 32
    %v90 = vsel %vm89, %v63, 0.0
    %v91 = vsel %vm89, %v64, 0.0
    %92 = vadd.xlane.f32.xlu0 %v90
    %v93 = vpop.xlane.xlu0 %92
    %94 = vadd.xlane.f32.xlu0 %v91
    %v95 = vpop.xlane.xlu0 %94
    %96 = vset.pattern.permute.xlu0 0
    %97 = vperm.xlu0 %96, %v65
    %v98 = vpop.permute.xlu0 %97
    %99 = vset.pattern.permute.xlu0 0
    %100 = vperm.xlu0 %99, %v66
    %v101 = vpop.permute.xlu0 %100
    %vm102 = vcmp.eq.s32.totalorder %v68, %v98
    %vm103 = vcmp.eq.s32.totalorder %v68, %v101
    %v104 = vsel %vm102, %v63, 0.0
    %v105 = vsel %vm103, %v64, 0.0
    %106 = vadd.xlane.f32.xlu0 %v104
    %v107 = vpop.xlane.xlu0 %106
    %108 = vadd.xlane.f32.xlu0 %v105
    %v109 = vpop.xlane.xlu0 %108
    %v110 = vmul.f32 %v87, 32.0
    %v111 = vmul.f32 %v88, 32.0
    %v112 = vsub.f32 %v93, %v110
    %v113 = vsub.f32 %v95, %v111
    %v114 = vmul.f32 %v112, 0.0016129032
    %v115 = vmul.f32 %v113, 0.0016129032
    %v116 = vsub.f32 %v107, %v87
    %v117 = vsub.f32 %v109, %v88
    %v118 = vmul.f32 %v116, 0.9483871
    %v119 = vmul.f32 %v117, 0.9483871
    %v120 = vadd.f32 %v114, %v118
    %v121 = vadd.f32 %v115, %v119
    %s122 = sadd.s32 0, 0
    %s123 = smul.u32 %s122, 16
    %v124 = vlaneseq
    %v125 = vshrl.u32 %v124, 7
    %v126 = vadd.s32 %v125, 8
    %v127 = vstv %s123
    %v128 = vadd.s32 %v127, %v125
    %v129 = vadd.s32 %v127, %v126
    %vm130 = vcmp.lt.s32.totalorder %v128, 16
    %vm131 = vcmp.lt.s32.totalorder %v129, 16
    %v132 = vsel %vm130, %v120, 0.0
    %v133 = vsel %vm131, %v121, 0.0
    %v134 = vld [vmem:[#allocation2] sm:$0xff]
    %v135 = vld [vmem:[#allocation2 + $0x8] sm:$0xff]
    %v136 = vadd.f32 %v134, %v132
    %v137 = vadd.f32 %v135, %v133
    %vm138 = vcmask 7168
    %139 = vst.msk [vmem:[#allocation2] sm:$0xff] %vm138, %v136
    %140 = vst.msk [vmem:[#allocation2 + $0x8] sm:$0xff] %vm138, %v137
    // Predicated region
    $region14: #{tpu_custom_call.1} parent=1 // pred_check
      %p141 = pneg %p56
    $region15: #{tpu_custom_call.1} parent=1 // pred_check_branch
      %143 = sbr.rel (%p141) target = $region17
    $region16: #{tpu_custom_call.1} parent=1 // pred_region
      %v144 = vld [vmem:[#allocation2] sm:$0xff]
      %v145 = vld [vmem:[#allocation2 + $0x8] sm:$0xff]
      %v146 = vsel %vm138, %v144, 0.0
      %v147 = vsel %vm138, %v145, 0.0
      %v148 = vadd.f32 %v146, %v147
      %149 = vadd.xlane.f32.xlu0 %v148
      %v150 = vpop.xlane.xlu0 %149
      %v151 = vrot.slane %v150, 4
      %v152 = vadd.f32 %v150, %v151
      %v153 = vrot.slane %v152, 2
      %v154 = vadd.f32 %v152, %v153
      %v155 = vrot.slane %v154, 1
      %v156 = vadd.f32 %v154, %v155
      %s157 = vtos %v156
      %s158 = ssub.f32 0.0, %s157
      %v159 = vstv %s158
      %160 = vst [vmem:[#allocation3] sm:$0xff] %v159
    $region17: #{tpu_custom_call.1} parent=1 // pred_fallthru
      _
    // Predicated region
    $region18: #{tpu_custom_call.1} parent=1 // pred_check
      _
    $region19: #{tpu_custom_call.1} parent=1 // pred_check_branch
      %162 = sbr.rel (0) target = $region21
    $region20: #{tpu_custom_call.1} parent=1 // pred_region
      %164 = vsyncadd [#allocation4], 0
      %s166 = sshll.u32 [#allocation3], 4
      %s167 = int_to_ptr.vmem [resolvable:$true] %s166
      %s168 = sshll.u32 %s2, 4
      %s169 = int_to_ptr.hbm [resolvable:$true] %s168
      %171 = dma.vmem_to_hbm [thread:$0]  %s167, 128, %s169, [#allocation4]
    $region21: #{tpu_custom_call.1} parent=1 // pred_fallthru
      _
    // Predicated region
    $region22: #{tpu_custom_call.1} parent=1 // pred_check
      _
    $region23: #{tpu_custom_call.1} parent=1 // pred_check_branch
      %173 = sbr.rel (0) target = $region25
    $region24: #{tpu_custom_call.1} parent=1 // pred_region
      %175 = dma.done [#allocation4], 128
    $region25: #{tpu_custom_call.1} parent=1 // pred_fallthru
      _
    %176 = vsyncpa [#allocation4], 1

</llo_original>
